<compile_context>
chip_gen: v7x
topology: tpu7x:2x2x1
jax: 0.10.0
libtpu: 0.0.40
codegen_flags: <defaults>
</compile_context>

<pallas_src>
import functools

import jax
import jax.numpy as jnp
from jax import lax
from jax.experimental import pallas as pl
from jax.experimental.pallas import tpu as pltpu


def _round_up(x, m):
    return ((x + m - 1) // m) * m


def _triplet_kernel(feat_ref, sq_col_ref, sq_row_ref, tgt_col_ref, tgt_row_ref,
                    hinge_ref, corr_ref, *, margin, tm, n_valid, masked):
    """One anchor-row tile: (tm, n_pad) distance slab -> per-row hinge/correct."""
    i = pl.program_id(0)
    row0 = pl.multiple_of(i * tm, tm)

    a = feat_ref[pl.ds(row0, tm), :]          # (tm, d_pad) bf16 anchor tile (sliced, no 2nd DMA)
    b = feat_ref[...]                         # (n_pad, d_pad) bf16, VMEM-resident across the grid
    a_sq = sq_col_ref[pl.ds(row0, tm), :]     # (tm, 1)  f32, hoisted norms
    b_sq = sq_row_ref[...]                    # (1, n_pad) f32, hoisted norms

    # Gram matrix on the MXU (A @ B^T without materializing a transpose).
    gram = lax.dot_general(a, b, (((1,), (1,)), ((), ())),
                           preferred_element_type=jnp.float32)   # (tm, n_pad)

    d2 = a_sq + b_sq - 2.0 * gram             # f32 assembly
    dist = jnp.sqrt(jnp.maximum(d2, 1e-12))

    t_a = tgt_col_ref[pl.ds(row0, tm), :]     # (tm, 1) int32
    t_b = tgt_row_ref[...]                    # (1, n_pad) int32
    pos = t_a == t_b
    neg = jnp.logical_not(pos)

    if masked:
        # Exclude zero-padded columns from both the positive max and negative min.
        col_ok = lax.broadcasted_iota(jnp.int32, pos.shape, 1) < n_valid
        pos = jnp.logical_and(pos, col_ok)
        neg = jnp.logical_and(neg, col_ok)

    dist_ap = jnp.max(jnp.where(pos, dist, -jnp.inf), axis=1, keepdims=True)
    dist_an = jnp.min(jnp.where(neg, dist, jnp.inf), axis=1, keepdims=True)

    # Per-row outputs; final mean / count done in the wrapper (keeps the grid
    # axis fully parallel — no shared accumulators, megacore-safe on v7x).
    hinge_ref[...] = jnp.maximum(dist_ap - dist_an + margin, 0.0)
    corr_ref[...] = jnp.where(dist_an >= dist_ap, 1.0, 0.0)


def ori_triplet_loss(inputs, targets, *, margin=0.3, block_rows=None,
                     use_bf16=True):
    """Pallas implementation of OriTripletLoss.forward.

    inputs:  (n, feat_dim) float features
    targets: (n,) integer labels
    Returns (loss: float32 scalar, correct: int32 scalar).
    """
    x = jnp.asarray(inputs, jnp.float32)
    targets = jnp.asarray(targets, jnp.int32)
    n, d = x.shape

    # Lane-dense feature dim; (8,128)-compliant row tile.
    d_pad = max(_round_up(d, 128), 128)
    if block_rows is None:
        n8 = _round_up(n, 8)
        tm = n8 if n8 <= 512 else 256          # single-shot grid for typical batches
    else:
        tm = _round_up(int(block_rows), 8)
    n_pad = _round_up(n, tm)
    num_blocks = n_pad // tm

    # Hoisted squared norms (computed once, f32) + bf16 features for the MXU.
    sq = jnp.sum(x * x, axis=1)                                    # (n,) f32
    feat = x.astype(jnp.bfloat16) if use_bf16 else x
    if d_pad != d:
        feat = jnp.pad(feat, ((0, 0), (0, d_pad - d)))
    if n_pad != n:
        feat = jnp.pad(feat, ((0, n_pad - n), (0, 0)))
        sq = jnp.pad(sq, (0, n_pad - n))
        targets_p = jnp.pad(targets, (0, n_pad - n), constant_values=-1)
    else:
        targets_p = targets

    sq_col = sq.reshape(n_pad, 1)
    sq_row = sq.reshape(1, n_pad)
    tgt_col = targets_p.reshape(n_pad, 1)
    tgt_row = targets_p.reshape(1, n_pad)

    kernel = functools.partial(_triplet_kernel, margin=float(margin), tm=tm,
                               n_valid=n, masked=(n_pad != n))

    # Only raise the scoped-VMEM limit when the resident footprint needs it.
    itemsize = 2 if use_bf16 else 4
    resident = n_pad * d_pad * itemsize
    temporaries = 10 * tm * n_pad * 4
    est = 2 * resident + temporaries + (4 << 20)
    vmem_limit = int(min(est, 100 << 20)) if est > (32 << 20) else None

    hinge, corr = pl.pallas_call(
        kernel,
        out_shape=(jax.ShapeDtypeStruct((n_pad, 1), jnp.float32),
                   jax.ShapeDtypeStruct((n_pad, 1), jnp.float32)),
        grid=(num_blocks,),
        in_specs=[
            pl.BlockSpec((n_pad, d_pad), lambda i: (0, 0)),   # features (resident, DMA'd once)
            pl.BlockSpec((n_pad, 1), lambda i: (0, 0)),       # squared norms, column view
            pl.BlockSpec((1, n_pad), lambda i: (0, 0)),       # squared norms, row view
            pl.BlockSpec((n_pad, 1), lambda i: (0, 0)),       # labels, column view
            pl.BlockSpec((1, n_pad), lambda i: (0, 0)),       # labels, row view
        ],
        out_specs=(
            pl.BlockSpec((tm, 1), lambda i: (i, 0)),          # per-row hinge
            pl.BlockSpec((tm, 1), lambda i: (i, 0)),          # per-row correct indicator
        ),
        compiler_params=pltpu.CompilerParams(
            dimension_semantics=("parallel",),
            vmem_limit_bytes=vmem_limit),
    )(feat, sq_col, sq_row, tgt_col, tgt_row)

    loss = jnp.sum(hinge[:n, 0]) / jnp.float32(n)       # MarginRankingLoss mean
    correct = jnp.sum(corr[:n, 0]).astype(jnp.int32)    # exact for n < 2^24
    return loss, correct


def _reference(inputs, targets, margin):
    """Pure-JAX reference (exact element-wise distances, no MXU)."""
    x = jnp.asarray(inputs, jnp.float32)
    diff = x[:, None, :] - x[None, :, :]
    dist = jnp.sqrt(jnp.maximum(jnp.sum(diff * diff, axis=-1), 1e-12))
    mask = targets[:, None] == targets[None, :]
    dist_ap = jnp.max(jnp.where(mask, dist, -jnp.inf), axis=1)
    dist_an = jnp.min(jnp.where(mask, jnp.inf, dist), axis=1)
    loss = jnp.mean(jnp.maximum(dist_ap - dist_an + margin, 0.0))
    correct = jnp.sum(dist_an >= dist_ap).astype(jnp.int32)
    return loss, correct


if __name__ == "__main__":
    key = jax.random.PRNGKey(0)
    k_centers, k_noise = jax.random.split(key)

    num_classes, per_class, feat_dim = 8, 4, 64
    n = num_classes * per_class                       # batch_size = 32

    # Well-separated class clusters so every row's (dist_ap, dist_an) gap is
    # O(10): max/min/hinge/compare decisions are far from any boundary and the
    # check is robust to bf16 MXU precision.
    centers = 3.0 * jax.random.normal(k_centers, (num_classes, feat_dim), jnp.float32)
    noise = jax.random.normal(k_noise, (n, feat_dim), jnp.float32)
    inputs = jnp.repeat(centers, per_class, axis=0) + noise
    targets = jnp.repeat(jnp.arange(num_classes, dtype=jnp.int32), per_class)

    test_cases = [
        (inputs, targets, None),          # single-shot: grid=(1,), tm=32, d padded 64->128
        (inputs, targets, 8),             # multi-tile "parallel" path: grid=(4,)
        (inputs[:29], targets[:29], None),  # ragged n: exercises row/column padding masks
    ]

    # margin=0.3 (module default, all hinges clamp to 0) and a large margin
    # (all hinges active) to exercise both sides of the clamp.
    for margin in (0.3, 30.0):
        for x, t, br in test_cases:
            loss, correct = ori_triplet_loss(x, t, margin=margin, block_rows=br)
            loss = jax.block_until_ready(loss)
            correct = jax.block_until_ready(correct)

            ref_loss, ref_correct = _reference(x, t, margin)
            assert jnp.allclose(loss, ref_loss, rtol=5e-2, atol=5e-2), \
                (margin, br, float(loss), float(ref_loss))
            assert int(correct) == int(ref_correct), \
                (margin, br, int(correct), int(ref_correct))

    print("KERNEL_OK")
</pallas_src>

<mosaic_0001>
module attributes {stable_mosaic.version = 11 : i64} {
  func.func @_triplet_kernel(%arg0: i32, %arg1: memref<32x128xbf16, #tpu.memory_space<vmem>>, %arg2: memref<32x1xf32, #tpu.memory_space<vmem>>, %arg3: memref<1x32xf32, #tpu.memory_space<vmem>>, %arg4: memref<32x1xi32, #tpu.memory_space<vmem>>, %arg5: memref<1x32xi32, #tpu.memory_space<vmem>>, %arg6: memref<32x1xf32, #tpu.memory_space<vmem>>, %arg7: memref<32x1xf32, #tpu.memory_space<vmem>>) attributes {dimension_semantics = [#tpu.dimension_semantics<parallel>], iteration_bounds = array<i64: 1>, scalar_prefetch = 0 : i64, scratch_operands = 0 : i64, tpu.core_type = #tpu.core_type<tc>, window_params = [{pipeline_mode = #tpu.pipeline_mode<synchronous>, transform_indices = @transform_0, window_bounds = array<i64: 32, 128>}, {pipeline_mode = #tpu.pipeline_mode<synchronous>, transform_indices = @transform_1, window_bounds = array<i64: 32, 1>}, {pipeline_mode = #tpu.pipeline_mode<synchronous>, transform_indices = @transform_2, window_bounds = array<i64: 1, 32>}, {pipeline_mode = #tpu.pipeline_mode<synchronous>, transform_indices = @transform_3, window_bounds = array<i64: 32, 1>}, {pipeline_mode = #tpu.pipeline_mode<synchronous>, transform_indices = @transform_4, window_bounds = array<i64: 1, 32>}, {transform_indices = @transform_5, window_bounds = array<i64: 32, 1>}, {transform_indices = @transform_6, window_bounds = array<i64: 32, 1>}]} {
    %c32_i32 = arith.constant 32 : i32
    %0 = arith.muli %arg0, %c32_i32 : i32
    %1 = tpu.assume_multiple %0, 32 : i32
    %2 = arith.index_cast %1 : i32 to index
    %c0 = arith.constant 0 : index
    %3 = vector.load %arg1[%2, %c0] : memref<32x128xbf16, #tpu.memory_space<vmem>>, vector<32x128xbf16>
    %c0_0 = arith.constant 0 : index
    %c0_1 = arith.constant 0 : index
    %4 = vector.load %arg1[%c0_0, %c0_1] : memref<32x128xbf16, #tpu.memory_space<vmem>>, vector<32x128xbf16>
    %5 = arith.index_cast %1 : i32 to index
    %c0_2 = arith.constant 0 : index
    %6 = vector.load %arg2[%5, %c0_2] : memref<32x1xf32, #tpu.memory_space<vmem>>, vector<32x1xf32>
    %c0_3 = arith.constant 0 : index
    %c0_4 = arith.constant 0 : index
    %7 = vector.load %arg3[%c0_3, %c0_4] : memref<1x32xf32, #tpu.memory_space<vmem>>, vector<1x32xf32>
    %cst = arith.constant dense<0.000000e+00> : vector<32x32xf32>
    %8 = tpu.matmul %3, %4, %cst {dimension_numbers = #tpu.dot_dimension_numbers<[1], [1], [0], [0], [0, 0, 1, 0], [], []>} : vector<32x128xbf16>, vector<32x128xbf16>, vector<32x32xf32> -> vector<32x32xf32>
    %9 = vector.broadcast %6 : vector<32x1xf32> to vector<32x32xf32>
    %10 = vector.broadcast %7 : vector<1x32xf32> to vector<32x32xf32>
    %11 = arith.addf %9, %10 : vector<32x32xf32>
    %cst_5 = arith.constant 2.000000e+00 : f32
    %12 = vector.broadcast %cst_5 : f32 to vector<32x32xf32>
    %13 = arith.mulf %12, %8 : vector<32x32xf32>
    %14 = arith.subf %11, %13 : vector<32x32xf32>
    %cst_6 = arith.constant 9.99999996E-13 : f32
    %15 = vector.broadcast %cst_6 : f32 to vector<32x32xf32>
    %16 = arith.maximumf %14, %15 : vector<32x32xf32>
    %17 = math.sqrt %16 : vector<32x32xf32>
    %18 = arith.index_cast %1 : i32 to index
    %c0_7 = arith.constant 0 : index
    %19 = vector.load %arg4[%18, %c0_7] : memref<32x1xi32, #tpu.memory_space<vmem>>, vector<32x1xi32>
    %c0_8 = arith.constant 0 : index
    %c0_9 = arith.constant 0 : index
    %20 = vector.load %arg5[%c0_8, %c0_9] : memref<1x32xi32, #tpu.memory_space<vmem>>, vector<1x32xi32>
    %21 = vector.broadcast %19 : vector<32x1xi32> to vector<32x32xi32>
    %22 = vector.broadcast %20 : vector<1x32xi32> to vector<32x32xi32>
    %23 = arith.cmpi eq, %21, %22 : vector<32x32xi32>
    %cst_10 = arith.constant dense<true> : vector<32x32xi1>
    %24 = arith.xori %23, %cst_10 : vector<32x32xi1>
    %cst_11 = arith.constant 0xFF800000 : f32
    %25 = vector.broadcast %cst_11 : f32 to vector<32x32xf32>
    %26 = arith.select %23, %17, %25 : vector<32x32xi1>, vector<32x32xf32>
    %cst_12 = arith.constant dense<0xFF800000> : vector<32xf32>
    %27 = vector.multi_reduction <maximumf>, %26, %cst_12 [1] : vector<32x32xf32> to vector<32xf32>
    %28 = vector.shape_cast %27 : vector<32xf32> to vector<32x1xf32>
    %cst_13 = arith.constant 0x7F800000 : f32
    %29 = vector.broadcast %cst_13 : f32 to vector<32x32xf32>
    %30 = arith.select %24, %17, %29 : vector<32x32xi1>, vector<32x32xf32>
    %cst_14 = arith.constant dense<0x7F800000> : vector<32xf32>
    %31 = vector.multi_reduction <minimumf>, %30, %cst_14 [1] : vector<32x32xf32> to vector<32xf32>
    %32 = vector.shape_cast %31 : vector<32xf32> to vector<32x1xf32>
    %33 = arith.subf %28, %32 : vector<32x1xf32>
    %cst_15 = arith.constant 3.000000e-01 : f32
    %34 = vector.broadcast %cst_15 : f32 to vector<32x1xf32>
    %35 = arith.addf %33, %34 : vector<32x1xf32>
    %cst_16 = arith.constant 0.000000e+00 : f32
    %36 = vector.broadcast %cst_16 : f32 to vector<32x1xf32>
    %37 = arith.maximumf %35, %36 : vector<32x1xf32>
    %c0_17 = arith.constant 0 : index
    %c0_18 = arith.constant 0 : index
    %38 = vector.load %arg6[%c0_17, %c0_18] : memref<32x1xf32, #tpu.memory_space<vmem>>, vector<32x1xf32>
    tpu.vector_store %arg6[%c0_17, %c0_18], %37 {strides = array<i32>} : memref<32x1xf32, #tpu.memory_space<vmem>>, vector<32x1xf32>,
    %39 = arith.cmpf oge, %32, %28 : vector<32x1xf32>
    %cst_19 = arith.constant 1.000000e+00 : f32
    %cst_20 = arith.constant 0.000000e+00 : f32
    %40 = vector.broadcast %cst_19 : f32 to vector<32x1xf32>
    %41 = vector.broadcast %cst_20 : f32 to vector<32x1xf32>
    %42 = arith.select %39, %40, %41 : vector<32x1xi1>, vector<32x1xf32>
    %c0_21 = arith.constant 0 : index
    %c0_22 = arith.constant 0 : index
    %43 = vector.load %arg7[%c0_21, %c0_22] : memref<32x1xf32, #tpu.memory_space<vmem>>, vector<32x1xf32>
    tpu.vector_store %arg7[%c0_21, %c0_22], %42 {strides = array<i32>} : memref<32x1xf32, #tpu.memory_space<vmem>>, vector<32x1xf32>,
    return
  }
  func.func @transform_0(%arg0: i32) -> (i32, i32) {
    %c0_i32 = arith.constant 0 : i32
    %c0_i32_0 = arith.constant 0 : i32
    %c0_i32_1 = arith.constant 0 : i32
    return %c0_i32, %c0_i32_0 : i32, i32
  }
  func.func @transform_1(%arg0: i32) -> (i32, i32) {
    %c0_i32 = arith.constant 0 : i32
    %c0_i32_0 = arith.constant 0 : i32
    %c0_i32_1 = arith.constant 0 : i32
    return %c0_i32, %c0_i32_0 : i32, i32
  }
  func.func @transform_2(%arg0: i32) -> (i32, i32) {
    %c0_i32 = arith.constant 0 : i32
    %c0_i32_0 = arith.constant 0 : i32
    %c0_i32_1 = arith.constant 0 : i32
    return %c0_i32, %c0_i32_0 : i32, i32
  }
  func.func @transform_3(%arg0: i32) -> (i32, i32) {
    %c0_i32 = arith.constant 0 : i32
    %c0_i32_0 = arith.constant 0 : i32
    %c0_i32_1 = arith.constant 0 : i32
    return %c0_i32, %c0_i32_0 : i32, i32
  }
  func.func @transform_4(%arg0: i32) -> (i32, i32) {
    %c0_i32 = arith.constant 0 : i32
    %c0_i32_0 = arith.constant 0 : i32
    %c0_i32_1 = arith.constant 0 : i32
    return %c0_i32, %c0_i32_0 : i32, i32
  }
  func.func @transform_5(%arg0: i32) -> (i32, i32) {
    %c0_i32 = arith.constant 0 : i32
    %c0_i32_0 = arith.constant 0 : i32
    return %arg0, %c0_i32 : i32, i32
  }
  func.func @transform_6(%arg0: i32) -> (i32, i32) {
    %c0_i32 = arith.constant 0 : i32
    %c0_i32_0 = arith.constant 0 : i32
    return %arg0, %c0_i32 : i32, i32
  }
}

</mosaic_0001>

<llo_original>
// kernel: tpu_custom_call.1
$region0: #{tpu_custom_call.1}
  #allocation0 [shape = 'u32[]', space=smem, size = 0x4, offset = 0x4, fixed_abs, tag = 'smem constant byte address 0x4 - core index']
  #allocation1 [shape = 'u32[144,128]{1,0:T(1,128)}', space=vmem, size = 0x12000, scoped, tag = 'internal scratch']
  %s0 = inlined_call_operand.vmem [shape: bf16[32,128], index: 0, kind: input, shape index: {}]
  %s1 = inlined_call_operand.vmem [shape: f32[32,1], index: 1, kind: input, shape index: {}]
  %s2 = inlined_call_operand.vmem [shape: f32[1,32], index: 2, kind: input, shape index: {}]
  %s3 = inlined_call_operand.vmem [shape: s32[32,1], index: 3, kind: input, shape index: {}]
  %s4 = inlined_call_operand.vmem [shape: s32[1,32], index: 4, kind: input, shape index: {}]
  %s5 = inlined_call_operand.vmem [shape: f32[32,1], index: 5, kind: output, shape index: {0}]
  %s6 = inlined_call_operand.vmem [shape: f32[32,1], index: 6, kind: output, shape index: {1}]
  %7 = xla_tuple %s5, %s6
  %s8 = sld [smem:[#allocation0]]
  $region38: #{tpu_custom_call.1} parent=0
    _
  %s10 = ssub.s32 1, %s8
  %s11 = scalar_select 0, %s10, %s8
  // Predicated region
  $region2: #{tpu_custom_call.1} parent=0 // pred_check
    _
  $region3: #{tpu_custom_call.1} parent=0 // pred_check_branch
    %13 = sbr.rel (0) target = $region5
  $region4: #{tpu_custom_call.1} parent=0 // pred_region
    _
  $region5: #{tpu_custom_call.1} parent=0 // pred_fallthru
    _
  // Predicated region
  $region6: #{tpu_custom_call.1} parent=0 // pred_check
    _
  $region7: #{tpu_custom_call.1} parent=0 // pred_check_branch
    %15 = sbr.rel (0) target = $region9
  $region8: #{tpu_custom_call.1} parent=0 // pred_region
    _
  $region9: #{tpu_custom_call.1} parent=0 // pred_fallthru
    _
  // Predicated region
  $region10: #{tpu_custom_call.1} parent=0 // pred_check
    _
  $region11: #{tpu_custom_call.1} parent=0 // pred_check_branch
    %17 = sbr.rel (0) target = $region13
  $region12: #{tpu_custom_call.1} parent=0 // pred_region
    _
  $region13: #{tpu_custom_call.1} parent=0 // pred_fallthru
    _
  // Predicated region
  $region14: #{tpu_custom_call.1} parent=0 // pred_check
    _
  $region15: #{tpu_custom_call.1} parent=0 // pred_check_branch
    %19 = sbr.rel (0) target = $region17
  $region16: #{tpu_custom_call.1} parent=0 // pred_region
    _
  $region17: #{tpu_custom_call.1} parent=0 // pred_fallthru
    _
  // Predicated region
  $region18: #{tpu_custom_call.1} parent=0 // pred_check
    _
  $region19: #{tpu_custom_call.1} parent=0 // pred_check_branch
    %21 = sbr.rel (0) target = $region21
  $region20: #{tpu_custom_call.1} parent=0 // pred_region
    _
  $region21: #{tpu_custom_call.1} parent=0 // pred_fallthru
    _
  %s23 = smul.u32 0, 32
  %s24 = sshra.s32 %s23, 3
  %s25 = sand.u32 %s23, 7
  %s26 = smul.addr %s24, 4
  %s27 = scalar_lea.vmem %s0, %s26
  %v28 = vld [vmem:[%s27] sm:$0xf]
  %v29 = vld [vmem:[%s27 + $0x4] sm:$0xf]
  %v30 = vld [vmem:[%s27 + $0x8] sm:$0xf]
  %v31 = vld [vmem:[%s27 + $0xc] sm:$0xf]
  %v32 = vld [vmem:[%s0] sm:$0xf]
  %v33 = vld [vmem:[%s0 + $0x4] sm:$0xf]
  %v34 = vld [vmem:[%s0 + $0x8] sm:$0xf]
  %v35 = vld [vmem:[%s0 + $0xc] sm:$0xf]
  %s36 = scalar_lea.vmem %s1, %s23
  %v37 = vld [vmem:[%s36] sm:$0xff]
  %v38 = vld [vmem:[%s36 + $0x8] sm:$0xff]
  %v39 = vld [vmem:[%s36 + $0x10] sm:$0xff]
  %v40 = vld [vmem:[%s36 + $0x18] sm:$0xff]
  %v41 = vld [vmem:[%s2] sm:$0x1]
  %v46 = vunpack.c.l.b16 %v28
  %v47 = vunpack.c.l.b16 %v29
  %v48 = vunpack.c.l.b16 %v30
  %v49 = vunpack.c.l.b16 %v31
  %v50 = vpack.c.b16 %v47, %v46
  %v51 = vpack.c.b16 %v49, %v48
  %v58 = vunpack.c.l.b16 %v32
  %v59 = vunpack.c.l.b16 %v33
  %v60 = vunpack.c.l.b16 %v34
  %v61 = vunpack.c.l.b16 %v35
  %v62 = vpack.c.b16 %v59, %v58
  %v63 = vpack.c.b16 %v61, %v60
  %66 = vmatprep.subr.bf16.mxu0 0
  %67 = vmatpush1.bf16.xpose.msra.mxu0 %v62
  %68 = vmatprep.subr.bf16.mxu0 0
  %69 = vmatpush1.bf16.xpose.msra.mxu0 %v63
  %70 = vmatprep.subr.bf16.mxu0 0
  %71 = vmatpush1.bf16.xpose.msra.mxu0 0
  %72 = vmatprep.subr.bf16.mxu0 0
  %73 = vmatpush1.bf16.xpose.msra.mxu0 0
  %74 = vmatprep.subr.bf16.mxu0 0
  %75 = vmatpush1.bf16.xpose.msra.mxu0 0
  %76 = vmatprep.subr.bf16.mxu0 0
  %77 = vmatpush1.bf16.xpose.msra.mxu0 0
  %78 = vmatprep.subr.bf16.mxu0 0
  %79 = vmatpush1.bf16.xpose.msra.mxu0 0
  %80 = vmatprep.subr.bf16.mxu0 0
  %81 = vmatpush1.bf16.xpose.msra.mxu0 0
  %82 = vmatprep.subr.bf16.mxu0 0
  %83 = vmatpush1.bf16.xpose.msra.mxu0 0
  %84 = vmatprep.subr.bf16.mxu0 0
  %85 = vmatpush1.bf16.xpose.msra.mxu0 0
  %86 = vmatprep.subr.bf16.mxu0 0
  %87 = vmatpush1.bf16.xpose.msra.mxu0 0
  %88 = vmatprep.subr.bf16.mxu0 0
  %89 = vmatpush1.bf16.xpose.msra.mxu0 0
  %90 = vmatprep.subr.bf16.mxu0 0
  %91 = vmatpush1.bf16.xpose.msra.mxu0 0
  %92 = vmatprep.subr.bf16.mxu0 0
  %93 = vmatpush1.bf16.xpose.msra.mxu0 0
  %94 = vmatprep.subr.bf16.mxu0 0
  %95 = vmatpush1.bf16.xpose.msra.mxu0 0
  %96 = vmatprep.subr.bf16.mxu0 0
  %97 = vmatpush1.bf16.xpose.msra.mxu0 0
  %98 = vmatprep.mubr.bf16.mxu0 0
  %99 = vmatmul.mubr.bf16.gmra.mrb[0].mxu0 %v50
  %v100 = vpop.f32.mrb[0].mxu0
  %v101 = vadd.f32 0.0, %v100
  %v102 = vpop.f32.mrb[0].mxu0
  %v103 = vpop.f32.mrb[0].mxu0
  %v104 = vadd.f32 0.0, %v103
  %v105 = vpop.f32.mrb[0].mxu0
  %106 = vmatprep.mubr.bf16.mxu0 0
  %107 = vmatmul.mubr.bf16.gmra.mrb[0].mxu0 %v51
  %v108 = vpop.f32.mrb[0].mxu0
  %v109 = vadd.f32 0.0, %v108
  %v110 = vpop.f32.mrb[0].mxu0
  %v111 = vpop.f32.mrb[0].mxu0
  %v112 = vadd.f32 0.0, %v111
  %v113 = vpop.f32.mrb[0].mxu0
  %114 = vdwg.mxu0
  %116 = vset.pattern.permute.xlu0 0
  %117 = vperm.xlu0 %116, %v37
  %v118 = vpop.permute.xlu0 %117
  %121 = vset.pattern.permute.xlu0 0
  %122 = vperm.xlu0 %121, %v38
  %v123 = vpop.permute.xlu0 %122
  %126 = vset.pattern.permute.xlu0 0
  %127 = vperm.xlu0 %126, %v39
  %v128 = vpop.permute.xlu0 %127
  %131 = vset.pattern.permute.xlu0 0
  %132 = vperm.xlu0 %131, %v40
  %v133 = vpop.permute.xlu0 %132
  %v136 = vlaneseq
  %v137 = vshrl.u32 %v136, 7
  %v138 = vsub.s32 0, %v137
  %v139 = vrot.slane %v41, %v138
  %v141 = vadd.f32 %v118, %v139
  %v142 = vadd.f32 %v123, %v139
  %v143 = vadd.f32 %v128, %v139
  %v144 = vadd.f32 %v133, %v139
  %v145 = vmul.f32 %v101, 2.0
  %v146 = vmul.f32 %v104, 2.0
  %v147 = vmul.f32 %v109, 2.0
  %v148 = vmul.f32 %v112, 2.0
  %v149 = vsub.f32 %v141, %v145
  %v150 = vsub.f32 %v142, %v146
  %v151 = vsub.f32 %v143, %v147
  %v152 = vsub.f32 %v144, %v148
  %v153 = vmax.f32 %v149, 1e-12
  %v154 = vmax.f32 %v150, 1e-12
  %v155 = vmax.f32 %v151, 1e-12
  %v156 = vmax.f32 %v152, 1e-12
  %v157 = vrsqrt.pop %v153
  %v158 = vmul.f32 %v153, %v157
  %vm159 = vcmp.eq.f32.partialorder %v153, inf
  %v160 = vsel %vm159, %v153, %v158
  %vm161 = vcmp.eq.f32.partialorder %v153, 0.0
  %v162 = vand.u32 %v153, 2147483648
  %v163 = vsel %vm161, %v162, %v160
  %v164 = vrsqrt.pop %v154
  %v165 = vmul.f32 %v154, %v164
  %vm166 = vcmp.eq.f32.partialorder %v154, inf
  %v167 = vsel %vm166, %v154, %v165
  %vm168 = vcmp.eq.f32.partialorder %v154, 0.0
  %v169 = vand.u32 %v154, 2147483648
  %v170 = vsel %vm168, %v169, %v167
  %v171 = vrsqrt.pop %v155
  %v172 = vmul.f32 %v155, %v171
  %vm173 = vcmp.eq.f32.partialorder %v155, inf
  %v174 = vsel %vm173, %v155, %v172
  %vm175 = vcmp.eq.f32.partialorder %v155, 0.0
  %v176 = vand.u32 %v155, 2147483648
  %v177 = vsel %vm175, %v176, %v174
  %v178 = vrsqrt.pop %v156
  %v179 = vmul.f32 %v156, %v178
  %vm180 = vcmp.eq.f32.partialorder %v156, inf
  %v181 = vsel %vm180, %v156, %v179
  %vm182 = vcmp.eq.f32.partialorder %v156, 0.0
  %v183 = vand.u32 %v156, 2147483648
  %v184 = vsel %vm182, %v183, %v181
  %s185 = scalar_lea.vmem %s3, %s23
  %v186 = vld [vmem:[%s185] sm:$0xff]
  %v187 = vld [vmem:[%s185 + $0x8] sm:$0xff]
  %v188 = vld [vmem:[%s185 + $0x10] sm:$0xff]
  %v189 = vld [vmem:[%s185 + $0x18] sm:$0xff]
  %v190 = vld [vmem:[%s4] sm:$0x1]
  %191 = vset.pattern.permute.xlu0 0
  %192 = vperm.xlu0 %191, %v186
  %v193 = vpop.permute.xlu0 %192
  %194 = vset.pattern.permute.xlu0 0
  %195 = vperm.xlu0 %194, %v187
  %v196 = vpop.permute.xlu0 %195
  %197 = vset.pattern.permute.xlu0 0
  %198 = vperm.xlu0 %197, %v188
  %v199 = vpop.permute.xlu0 %198
  %200 = vset.pattern.permute.xlu0 0
  %201 = vperm.xlu0 %200, %v189
  %v202 = vpop.permute.xlu0 %201
  %v203 = vlaneseq
  %v204 = vshrl.u32 %v203, 7
  %v205 = vsub.s32 0, %v204
  %v206 = vrot.slane %v190, %v205
  %vm207 = vcmp.eq.s32.totalorder %v193, %v206
  %vm208 = vcmp.eq.s32.totalorder %v196, %v206
  %vm209 = vcmp.eq.s32.totalorder %v199, %v206
  %vm210 = vcmp.eq.s32.totalorder %v202, %v206
  %vm211 = vmxor %vm207, 1
  %vm212 = vmxor %vm208, 1
  %vm213 = vmxor %vm209, 1
  %vm214 = vmxor %vm210, 1
  %v215 = vsel %vm207, %v163, -inf
  %v216 = vsel %vm208, %v170, -inf
  %v217 = vsel %vm209, %v177, -inf
  %v218 = vsel %vm210, %v184, -inf
  %vm219 = vcmask 261120
  %v220 = vsel %vm219, %v215, -inf
  %221 = vmax.xlane.f32.xlu0 %v220
  %v222 = vpop.xlane.xlu0 %221
  %v223 = vsel %vm219, %v216, -inf
  %224 = vmax.xlane.f32.xlu0 %v223
  %v225 = vpop.xlane.xlu0 %224
  %v226 = vsel %vm219, %v217, -inf
  %227 = vmax.xlane.f32.xlu0 %v226
  %v228 = vpop.xlane.xlu0 %227
  %v229 = vsel %vm219, %v218, -inf
  %230 = vmax.xlane.f32.xlu0 %v229
  %v231 = vpop.xlane.xlu0 %230
  %v232 = vsel %vm211, %v163, inf
  %v233 = vsel %vm212, %v170, inf
  %v234 = vsel %vm213, %v177, inf
  %v235 = vsel %vm214, %v184, inf
  %v236 = vsel %vm219, %v232, inf
  %237 = vmin.xlane.f32.xlu0 %v236
  %v238 = vpop.xlane.xlu0 %237
  %v239 = vsel %vm219, %v233, inf
  %240 = vmin.xlane.f32.xlu0 %v239
  %v241 = vpop.xlane.xlu0 %240
  %v242 = vsel %vm219, %v234, inf
  %243 = vmin.xlane.f32.xlu0 %v242
  %v244 = vpop.xlane.xlu0 %243
  %v245 = vsel %vm219, %v235, inf
  %246 = vmin.xlane.f32.xlu0 %v245
  %v247 = vpop.xlane.xlu0 %246
  %v248 = vsub.f32 %v222, %v238
  %v249 = vsub.f32 %v225, %v241
  %v250 = vsub.f32 %v228, %v244
  %v251 = vsub.f32 %v231, %v247
  %v252 = vadd.f32 %v248, 0.3
  %v253 = vadd.f32 %v249, 0.3
  %v254 = vadd.f32 %v250, 0.3
  %v255 = vadd.f32 %v251, 0.3
  %v256 = vmax.f32 %v252, 0.0
  %v257 = vmax.f32 %v253, 0.0
  %v258 = vmax.f32 %v254, 0.0
  %v259 = vmax.f32 %v255, 0.0
  %vm260 = vcmask 7168
  %261 = vst.msk [vmem:[%s5] sm:$0xff] %vm260, %v256
  %262 = vst.msk [vmem:[%s5 + $0x8] sm:$0xff] %vm260, %v257
  %263 = vst.msk [vmem:[%s5 + $0x10] sm:$0xff] %vm260, %v258
  %264 = vst.msk [vmem:[%s5 + $0x18] sm:$0xff] %vm260, %v259
  %vm265 = vcmp.ge.f32.partialorder %v238, %v222
  %vm266 = vcmp.ge.f32.partialorder %v241, %v225
  %vm267 = vcmp.ge.f32.partialorder %v244, %v228
  %vm268 = vcmp.ge.f32.partialorder %v247, %v231
  %v269 = vsel %vm265, 1.0, 0.0
  %v270 = vsel %vm266, 1.0, 0.0
  %v271 = vsel %vm267, 1.0, 0.0
  %v272 = vsel %vm268, 1.0, 0.0
  %273 = vst.msk [vmem:[%s6] sm:$0xff] %vm260, %v269
  %274 = vst.msk [vmem:[%s6 + $0x8] sm:$0xff] %vm260, %v270
  %275 = vst.msk [vmem:[%s6 + $0x10] sm:$0xff] %vm260, %v271
  %276 = vst.msk [vmem:[%s6 + $0x18] sm:$0xff] %vm260, %v272
  // Predicated region
  $region22: #{tpu_custom_call.1} parent=0 // pred_check
    _
  $region23: #{tpu_custom_call.1} parent=0 // pred_check_branch
    %278 = sbr.rel (0) target = $region25
  $region24: #{tpu_custom_call.1} parent=0 // pred_region
    _
  $region25: #{tpu_custom_call.1} parent=0 // pred_fallthru
    _
  // Predicated region
  $region26: #{tpu_custom_call.1} parent=0 // pred_check
    _
  $region27: #{tpu_custom_call.1} parent=0 // pred_check_branch
    %280 = sbr.rel (0) target = $region29
  $region28: #{tpu_custom_call.1} parent=0 // pred_region
    _
  $region29: #{tpu_custom_call.1} parent=0 // pred_fallthru
    _
  // Predicated region
  $region30: #{tpu_custom_call.1} parent=0 // pred_check
    _
  $region31: #{tpu_custom_call.1} parent=0 // pred_check_branch
    %282 = sbr.rel (0) target = $region33
  $region32: #{tpu_custom_call.1} parent=0 // pred_region
    _
  $region33: #{tpu_custom_call.1} parent=0 // pred_fallthru
    _
  // Predicated region
  $region34: #{tpu_custom_call.1} parent=0 // pred_check
    _
  $region35: #{tpu_custom_call.1} parent=0 // pred_check_branch
    %284 = sbr.rel (0) target = $region37
  $region36: #{tpu_custom_call.1} parent=0 // pred_region
    _
  $region37: #{tpu_custom_call.1} parent=0 // pred_fallthru
    _

</llo_original>
